<compile_context>
chip_gen: v5e
topology: v5e:2x2
jax: 0.10.0
libtpu: 0.0.40
codegen_flags: <defaults>
</compile_context>

<pallas_src>
import jax
import jax.numpy as jnp
import numpy as np
from jax.experimental import pallas as pl
from jax.experimental.pallas import tpu as pltpu


def _round_up(x: int, m: int) -> int:
    return (x + m - 1) // m * m


def _pick_t_tile(T_out, B, N, K, in_bytes, out_bytes, t_tile_max,
                 vmem_budget=24 << 20):
    """Pick a lane-dense time tile (multiple of 128)."""
    assert t_tile_max % 128 == 0 and t_tile_max >= 128, \
        "t_tile_max must be a positive multiple of 128"
    t_tile = min(t_tile_max, _round_up(T_out, 128))
    # v7x has 2 TensorCores per chip: with B == 1 make sure the time axis
    # yields >= 2 parallel grid steps so the second core isn't idle.
    if B == 1:
        t_tile = min(t_tile, max(128, _round_up(-(-T_out // 2), 128)))
    # Double-buffered per-step VMEM: input frames (K, t) + output block (N, t).
    per_col = 2 * (N * out_bytes + K * in_bytes)
    while t_tile > 128 and t_tile * per_col > vmem_budget:
        t_tile -= 128
    return t_tile


def _conv1d_relu_kernel(y_ref, w_ref, out_ref):
    """One (batch, time-tile) block.

    y_ref   : (K, TT)  im2col frames for this batch/time tile (time on lanes), bf16
    w_ref   : (N, K)   Conv1d weight with in_channels squeezed, bf16
    out_ref : (N, TT)  output block (channels x time), lane-dense
    """
    acc = jnp.dot(w_ref[...], y_ref[...], preferred_element_type=jnp.float32)
    out_ref[...] = jnp.maximum(acc, 0.0).astype(out_ref.dtype)


def encoder_forward(x, weight, *, kernel_size, t_tile_max=2048,
                    compute_dtype=jnp.bfloat16, out_dtype=None):
    """x: (B, L), weight: (N, 1, K) torch Conv1d layout (bias=False).

    Returns relu(conv1d(x, weight, stride=K//2)) of shape (B, N, T_out).
    """
    B, L = x.shape
    N, in_ch, K = weight.shape
    assert K == kernel_size
    # TODO(synk): in_channels > 1 path (forward would take (B, C, L)) not implemented.
    assert in_ch == 1, "only the in_channels=1 forward path is supported"
    stride = kernel_size // 2
    assert stride >= 1, "kernel_size must be >= 2 (stride = kernel_size // 2)"
    assert L >= K, "input shorter than the kernel"
    T_out = (L - K) // stride + 1
    out_dtype = x.dtype if out_dtype is None else out_dtype

    in_bytes = jnp.dtype(compute_dtype).itemsize
    out_bytes = jnp.dtype(out_dtype).itemsize
    t_tile = _pick_t_tile(T_out, B, N, K, in_bytes, out_bytes, t_tile_max)

    # ---- wrapper-side layout plumbing (single XLA fusion): lane-dense im2col +
    # bf16 cast.  y[b, k, t] = x[b, t*stride + k]; no padding — the ragged last
    # time tile is handled by Pallas block clipping on both read and write.
    last = (T_out - 1) * stride
    cols = [x[:, k : k + last + 1 : stride] for k in range(K)]   # K x (B, T_out)
    y = jnp.stack(cols, axis=1).astype(compute_dtype)            # (B, K, T_out)
    w2d = weight.reshape(N, K).astype(compute_dtype)

    grid = (B, pl.cdiv(T_out, t_tile))
    cost = pl.CostEstimate(
        flops=2 * B * N * K * T_out,
        transcendentals=0,
        bytes_accessed=(B * K * T_out * in_bytes
                        + N * K * in_bytes
                        + B * N * T_out * out_bytes),
    )

    out = pl.pallas_call(
        _conv1d_relu_kernel,
        out_shape=jax.ShapeDtypeStruct((B, N, T_out), out_dtype),
        grid_spec=pltpu.PrefetchScalarGridSpec(
            num_scalar_prefetch=0,
            grid=grid,
            in_specs=[
                # frames: blocked over (batch, time-tile); batch dim squeezed
                pl.BlockSpec((None, K, t_tile), lambda b, t: (b, 0, t)),
                # weights: grid-invariant block (constant block index -> fetched once)
                pl.BlockSpec((N, K), lambda b, t: (0, 0)),
            ],
            out_specs=pl.BlockSpec((None, N, t_tile), lambda b, t: (b, 0, t)),
        ),
        compiler_params=pltpu.CompilerParams(
            dimension_semantics=("parallel", "parallel"),
        ),
        cost_estimate=cost,
    )(y, w2d)

    return out


# ------------------------- pure-JAX references (check) -----------------------
def reference(x, weight, kernel_size, cast_dtype=None):
    stride = kernel_size // 2
    if cast_dtype is not None:
        # Match the kernel's bf16 input rounding (accumulation stays f32).
        x = x.astype(cast_dtype).astype(jnp.float32)
        weight = weight.astype(cast_dtype).astype(jnp.float32)
    out = jax.lax.conv_general_dilated(
        x[:, None, :], weight,
        window_strides=(stride,), padding="VALID",
        dimension_numbers=("NCH", "OIH", "NCH"),
        precision=jax.lax.Precision.HIGHEST,
    )
    return jnp.maximum(out, 0.0)


# ---------------------------------- main -------------------------------------
if __name__ == "__main__":
    key = jax.random.PRNGKey(0)
    kx, kw = jax.random.split(key)

    # Small shapes matching the module docstring example:
    #   x = randn(2, 1000), Encoder(kernel_size=4, out_channels=64) -> (2, 64, 499)
    B, L = 2, 1000
    K, N = 4, 64

    x = jax.random.normal(kx, (B, L)).astype(jnp.float32)
    weight = (0.1 * jax.random.normal(kw, (N, 1, K))).astype(jnp.float32)

    out = encoder_forward(x, weight, kernel_size=K)
    out = jax.block_until_ready(out)

    T_out = (L - K) // (K // 2) + 1
    assert out.shape == (B, N, T_out), out.shape

    # Tight check against a reference with matched (bf16-rounded) inputs.
    ref_bf16_in = reference(x, weight, K, cast_dtype=jnp.bfloat16)
    assert np.allclose(np.asarray(out), np.asarray(ref_bf16_in),
                       atol=2e-5, rtol=1e-5)

    # Loose sanity check against the full-f32 module semantics.
    ref_f32 = reference(x, weight, K)
    assert np.allclose(np.asarray(out), np.asarray(ref_f32),
                       atol=6e-2, rtol=2e-2)

    print("KERNEL_OK")
</pallas_src>

<mosaic_0001>
module attributes {stable_mosaic.version = 11 : i64} {
  func.func @_conv1d_relu_kernel(%arg0: i32, %arg1: i32, %arg2: memref<1x4x512xbf16, #tpu.memory_space<vmem>>, %arg3: memref<64x4xbf16, #tpu.memory_space<vmem>>, %arg4: memref<1x64x512xf32, #tpu.memory_space<vmem>>) attributes {dimension_semantics = [#tpu.dimension_semantics<parallel>, #tpu.dimension_semantics<parallel>], iteration_bounds = array<i64: 2, 1>, scalar_prefetch = 0 : i64, scratch_operands = 0 : i64, tpu.core_type = #tpu.core_type<tc>, window_params = [{transform_indices = @transform_0, window_bounds = array<i64: 1, 4, 512>}, {pipeline_mode = #tpu.pipeline_mode<synchronous>, transform_indices = @transform_1, window_bounds = array<i64: 64, 4>}, {transform_indices = @transform_2, window_bounds = array<i64: 1, 64, 512>}]} {
    %c0 = arith.constant 0 : index
    %c0_0 = arith.constant 0 : index
    %0 = vector.load %arg3[%c0, %c0_0] : memref<64x4xbf16, #tpu.memory_space<vmem>>, vector<64x4xbf16>
    %c0_1 = arith.constant 0 : index
    %c0_2 = arith.constant 0 : index
    %c0_3 = arith.constant 0 : index
    %1 = vector.load %arg2[%c0_1, %c0_2, %c0_3] : memref<1x4x512xbf16, #tpu.memory_space<vmem>>, vector<1x4x512xbf16>
    %2 = vector.shape_cast %1 : vector<1x4x512xbf16> to vector<4x512xbf16>
    %cst = arith.constant dense<0.000000e+00> : vector<64x512xf32>
    %3 = tpu.matmul %0, %2, %cst {dimension_numbers = #tpu.dot_dimension_numbers<[1], [0], [0], [1], [0, 0, 1, 1], [], []>} : vector<64x4xbf16>, vector<4x512xbf16>, vector<64x512xf32> -> vector<64x512xf32>
    %cst_4 = arith.constant 0.000000e+00 : f32
    %4 = vector.broadcast %cst_4 : f32 to vector<64x512xf32>
    %5 = arith.maximumf %3, %4 : vector<64x512xf32>
    %c0_5 = arith.constant 0 : index
    %c0_6 = arith.constant 0 : index
    %c0_7 = arith.constant 0 : index
    %6 = vector.load %arg4[%c0_5, %c0_6, %c0_7] : memref<1x64x512xf32, #tpu.memory_space<vmem>>, vector<1x64x512xf32>
    %7 = vector.shape_cast %6 : vector<1x64x512xf32> to vector<64x512xf32>
    %8 = vector.shape_cast %5 : vector<64x512xf32> to vector<1x64x512xf32>
    tpu.vector_store %arg4[%c0_5, %c0_6, %c0_7], %8 {strides = array<i32>} : memref<1x64x512xf32, #tpu.memory_space<vmem>>, vector<1x64x512xf32>,
    return
  }
  func.func @transform_0(%arg0: i32, %arg1: i32) -> (i32, i32, i32) {
    %c0_i32 = arith.constant 0 : i32
    %c0_i32_0 = arith.constant 0 : i32
    return %arg0, %c0_i32, %arg1 : i32, i32, i32
  }
  func.func @transform_1(%arg0: i32, %arg1: i32) -> (i32, i32) {
    %c0_i32 = arith.constant 0 : i32
    %c0_i32_0 = arith.constant 0 : i32
    %c0_i32_1 = arith.constant 0 : i32
    return %c0_i32, %c0_i32_0 : i32, i32
  }
  func.func @transform_2(%arg0: i32, %arg1: i32) -> (i32, i32, i32) {
    %c0_i32 = arith.constant 0 : i32
    %c0_i32_0 = arith.constant 0 : i32
    return %arg0, %c0_i32, %arg1 : i32, i32, i32
  }
}

</mosaic_0001>

<llo_original>
// kernel: tpu_custom_call.1
$region0: #{tpu_custom_call.1}
  #allocation0 [shape = 'u32[]', space=smem, size = 0x4, offset = 0x4, fixed_abs, tag = 'smem constant byte address 0x4 - core index']
  #allocation1 [shape = 'u32[72,128]{1,0:T(1,128)}', space=vmem, size = 0x9000, scoped, tag = 'internal scratch']
  %s0 = inlined_call_operand.vmem [shape: bf16[2,4,499], index: 0, kind: input, shape index: {}]
  %s1 = inlined_call_operand.vmem [shape: bf16[64,4], index: 1, kind: input, shape index: {}]
  %s2 = inlined_call_operand.hbm [shape: f32[2,64,499], index: 2, kind: output, shape index: {}]
  %s3 = sld [smem:[#allocation0]]
  $region41: #{tpu_custom_call.1} parent=0
    _
  %s5 = ssub.s32 1, %s3
  %s6 = scalar_select 0, %s5, %s3
  $region1: #{tpu_custom_call.1} parent=0
    #allocation2 [shape = 'u8[262144]{0}', space=vmem, size = 0x40000, scoped, tag = 'output window, operand 0']
    #allocation3 [shape = 's32[2]{0}', space=sflag, size = 0x8, scoped, tag = 'scoped memory for tpu_custom_call.1']
    %7 = vsyncpa [#allocation3], 0
    %s8 = scalar_lea.sflag [#allocation3], 1
    %9 = vsyncpa %s8, 0
    loop: start=0, step=1, limit=4
    $region2: #{tpu_custom_call.1} parent=1 // loop_pre_header
      _
    $region3: #{tpu_custom_call.1} parent=1 // loop_header
      %s11 = sphi 0, %s15
      %p12 = scmp.ge.s32.totalorder %s11, 4
      %s18 = sphi 0, %s30
      %s19 = sphi 0, %s26
      %s20 = sphi 0, %s18
      %s21 = sphi 0, %s19
      %s22 = sphi 0, %s20
      %s23 = sphi 0, %s21
      %s35 = sphi 0, %s37
      %s38 = sphi 0, %s35
      %s39 = sphi 0, %s38
      %s55 = sphi 0, %s39
      %s59 = sphi 0, %s59
      %s61 = sphi 0, %s59
      %s62 = sphi 0, %s61
      %s76 = sphi 0, %s62
      %s84 = sphi 0, %s86
      %s87 = sphi 0, %s84
      %s88 = sphi 0, %s87
      %s104 = sphi 0, %s88
    $region4: #{tpu_custom_call.1} parent=1 // loop_header_branch
      %14 = sbr.rel (%p12) target = $region8
    $region5: #{tpu_custom_call.1} parent=1 // loop_body
      %s16 = ssub.s32 %s11, 1
      %s17 = ssub.s32 %s11, 2
      %s24 = sadd.s32 1, %s19
      %p25 = scmp.ge.s32.totalorder %s24, 1
      %s26 = scalar_select %p25, 0, %s24
      %s27 = sadd.s32 1, %s18
      %s28 = scalar_select %p25, %s27, %s18
      %p29 = scmp.ge.s32.totalorder %s28, 2
      %s30 = scalar_select %p29, 0, %s28
      %s31 = ssub.s32 %s18, %s30
      %s32 = ssub.s32 %s19, %s26
      %s33 = sor.u32 %s31, %s32
      %p34 = scmp.eq.s32.totalorder %s33, 0
      %s36 = sadd.s32 %s35, 1
      %s37 = scalar_select %p34, %s35, %s36
      %p40 = pneg %p34
      %p41 = scmp.eq.s32.totalorder %s11, 1
      %p42 = por %p40, %p41
      %p43 = scmp.ne.s32.totalorder %s35, %s38
      %p44 = scmp.eq.s32.totalorder %s11, 0
      %p45 = por %p43, %p44
      %p46 = scmp.ne.s32.totalorder %s35, %s38
      %p47 = scmp.eq.s32.totalorder %s16, 1
      %p48 = por %p46, %p47
      %p49 = scmp.ne.s32.totalorder %s38, %s39
      %p50 = scmp.eq.s32.totalorder %s16, 0
      %p51 = por %p49, %p50
      %p52 = scmp.ne.s32.totalorder %s38, %s39
      %p53 = scmp.eq.s32.totalorder %s17, 1
      %p54 = por %p52, %p53
      %p56 = scmp.ne.s32.totalorder %s39, %s55
      %p57 = scmp.eq.s32.totalorder %s17, 0
      %p58 = por %p56, %p57
      %s60 = sadd.s32 %s59, 1
      %p63 = scmp.eq.s32.totalorder %s11, 1
      %p64 = scmp.ne.s32.totalorder %s59, %s61
      %p65 = scmp.eq.s32.totalorder %s11, 0
      %p66 = por %p64, %p65
      %p67 = scmp.ne.s32.totalorder %s59, %s61
      %p68 = scmp.eq.s32.totalorder %s16, 1
      %p69 = por %p67, %p68
      %p70 = scmp.ne.s32.totalorder %s61, %s62
      %p71 = scmp.eq.s32.totalorder %s16, 0
      %p72 = por %p70, %p71
      %p73 = scmp.ne.s32.totalorder %s61, %s62
      %p74 = scmp.eq.s32.totalorder %s17, 1
      %p75 = por %p73, %p74
      %p77 = scmp.ne.s32.totalorder %s62, %s76
      %p78 = scmp.eq.s32.totalorder %s17, 0
      %p79 = por %p77, %p78
      %s80 = ssub.s32 %s18, %s30
      %s81 = ssub.s32 %s19, %s26
      %s82 = sor.u32 %s80, %s81
      %p83 = scmp.eq.s32.totalorder %s82, 0
      %s85 = sadd.s32 %s84, 1
      %s86 = scalar_select %p83, %s84, %s85
      %p89 = pneg %p83
      %p90 = scmp.eq.s32.totalorder %s11, 1
      %p91 = por %p89, %p90
      %p92 = scmp.ne.s32.totalorder %s84, %s87
      %p93 = scmp.eq.s32.totalorder %s11, 0
      %p94 = por %p92, %p93
      %p95 = scmp.ne.s32.totalorder %s84, %s87
      %p96 = scmp.eq.s32.totalorder %s16, 1
      %p97 = por %p95, %p96
      %p98 = scmp.ne.s32.totalorder %s87, %s88
      %p99 = scmp.eq.s32.totalorder %s16, 0
      %p100 = por %p98, %p99
      %p101 = scmp.ne.s32.totalorder %s87, %s88
      %p102 = scmp.eq.s32.totalorder %s17, 1
      %p103 = por %p101, %p102
      %p105 = scmp.ne.s32.totalorder %s88, %s104
      %p106 = scmp.eq.s32.totalorder %s17, 0
      %p107 = por %p105, %p106
      %p108 = scmp.le.s32.totalorder 1, %s11
      %p109 = scmp.lt.s32.totalorder %s11, 3
      %p110 = pnand %p108, %p109
      %p111 = pneg %p110
      // Predicated region
      $region9: #{tpu_custom_call.1} parent=5 // pred_check
        _
      $region10: #{tpu_custom_call.1} parent=5 // pred_check_branch
        %113 = sbr.rel (%p110) target = $region12
      $region11: #{tpu_custom_call.1} parent=5 // pred_region
        %s114 = ssub.s32 %s11, 1
        // Predicated region
        $region13: #{tpu_custom_call.1} parent=11 // pred_check
          %p115 = pneg %p72
        $region14: #{tpu_custom_call.1} parent=11 // pred_check_branch
          %117 = sbr.rel (%p115) target = $region16
        $region15: #{tpu_custom_call.1} parent=11 // pred_region
          _
        $region16: #{tpu_custom_call.1} parent=11 // pred_fallthru
          _
      $region12: #{tpu_custom_call.1} parent=5 // pred_fallthru
        _
      %p118 = scmp.lt.s32.totalorder %s11, 2
      // Predicated region
      $region17: #{tpu_custom_call.1} parent=5 // pred_check
        %p119 = pneg %p118
      $region18: #{tpu_custom_call.1} parent=5 // pred_check_branch
        %121 = sbr.rel (%p119) target = $region20
      $region19: #{tpu_custom_call.1} parent=5 // pred_region
        // Predicated region
        $region21: #{tpu_custom_call.1} parent=19 // pred_check
          %p122 = pneg %p45
        $region22: #{tpu_custom_call.1} parent=19 // pred_check_branch
          %124 = sbr.rel (%p122) target = $region24
        $region23: #{tpu_custom_call.1} parent=19 // pred_region
          %s125 = smul.u32 4, %s19
          %p126 = scmp.lt.s32.totalorder %s18, 1
          %s127 = scalar_select %p126, %s18, 1
          %p128 = scmp.lt.s32.totalorder %s125, 3
          %s129 = scalar_select %p128, %s125, 3
          %s130 = smul.addr %s127, 4
          %s131 = sadd.s32 %s129, %s130
          %s132 = smul.addr %s131, 2
          %s133 = scalar_lea.vmem %s0, %s132
          %s134 = smul.u32 4, %s19
        $region24: #{tpu_custom_call.1} parent=19 // pred_fallthru
          _
      $region20: #{tpu_custom_call.1} parent=5 // pred_fallthru
        _
      %p135 = scmp.le.s32.totalorder 1, %s11
      %p136 = scmp.lt.s32.totalorder %s11, 3
      %p137 = pnand %p135, %p136
      %p138 = pneg %p137
      // Predicated region
      $region25: #{tpu_custom_call.1} parent=5 // pred_check
        _
      $region26: #{tpu_custom_call.1} parent=5 // pred_check_branch
        %140 = sbr.rel (%p137) target = $region28
      $region27: #{tpu_custom_call.1} parent=5 // pred_region
        %s141 = ssub.s32 %s11, 1
        %s142 = smul.u32 4, %s21
        %p143 = scmp.lt.s32.totalorder %s20, 1
        %s144 = scalar_select %p143, %s20, 1
        %p145 = scmp.lt.s32.totalorder %s142, 3
        %s146 = scalar_select %p145, %s142, 3
        %s147 = smul.addr %s144, 4
        %s148 = sadd.s32 %s146, %s147
        %s149 = smul.addr %s148, 2
        %s150 = scalar_lea.vmem %s0, %s149
        %p151 = pneg %p51
        %p152 = pneg %p48
        %p153 = pneg %p72
        %p154 = pneg %p69
        %p155 = pneg %p100
        %p156 = pneg %p97
        %s157 = sand.u32 %s87, 1
        %s158 = scalar_lea.sflag [#allocation3], %s157
        %s159 = sand.u32 %s87, 1
        %s160 = smul.addr %s159, 256
        %s161 = scalar_lea.vmem [#allocation2], %s160
        %s162 = smul.u32 4, %s21
        %p163 = scmp.lt.s32.totalorder %s20, 1
        %s164 = scalar_select %p163, %s20, 1
        %p165 = scmp.lt.s32.totalorder %s162, 3
        %s166 = scalar_select %p165, %s162, 3
        %s167 = smul.addr %s164, 4
        %s168 = sadd.s32 %s166, %s167
        %s169 = smul.addr %s168, 2
        %s170 = scalar_lea.vmem %s0, %s169
        %s171 = smul.u32 4, %s21
        %s172 = smul.u32 4, %s21
        %v174 = vld [vmem:[%s1] sm:$0xf]
        %v175 = vld [vmem:[%s1 + $0x4] sm:$0xf]
        %v176 = vld [vmem:[%s1 + $0x8] sm:$0xf]
        %v177 = vld [vmem:[%s1 + $0xc] sm:$0xf]
        %v178 = vld [vmem:[%s1 + $0x10] sm:$0xf]
        %v179 = vld [vmem:[%s1 + $0x14] sm:$0xf]
        %v180 = vld [vmem:[%s1 + $0x18] sm:$0xf]
        %v181 = vld [vmem:[%s1 + $0x1c] sm:$0xf]
        %v182 = vld [vmem:[%s170] sm:$0xff]
        %v191 = vunpack.c.l.b16 %v174
        %v192 = vunpack.c.l.b16 %v175
        %v193 = vunpack.c.l.b16 %v176
        %v194 = vunpack.c.l.b16 %v177
        %v195 = vunpack.c.l.b16 %v178
        %v196 = vunpack.c.l.b16 %v179
        %v197 = vunpack.c.l.b16 %v180
        %v198 = vunpack.c.l.b16 %v181
        %v199 = vpack.c.b16 %v192, %v191
        %v200 = vpack.c.b16 %v194, %v193
        %v201 = vpack.c.b16 %v196, %v195
        %v202 = vpack.c.b16 %v198, %v197
        %204 = vst [vmem:[#allocation1] ss:$4 sm:$0xff] %v182
        %v205 = vld.sshfl [vmem:[#allocation1] sm:$0xff pattern:$0x73625140]
        %v206 = vld.sshfl [vmem:[#allocation1 + $0x8] sm:$0xff pattern:$0x73625140]
        %v207 = vld.sshfl [vmem:[#allocation1 + $0x10] sm:$0xff pattern:$0x73625140]
        %v208 = vld.sshfl [vmem:[#allocation1 + $0x18] sm:$0xff pattern:$0x73625140]
        %vm209 = vcmask 31744
        %v211 = vsel %vm209, %v199, 0
        %v214 = vsel %vm209, %v200, 0
        %v217 = vsel %vm209, %v201, 0
        %v220 = vsel %vm209, %v202, 0
        %vm222 = vcmask 1041408
        %v223 = vsel %vm222, %v205, 0
        %v225 = vsel %vm222, %v206, 0
        %v227 = vsel %vm222, %v207, 0
        %v229 = vsel %vm222, %v208, 0
        %231 = vmatpush.bf16.msra.mxu0 0
        %232 = vmatpush.bf16.msra.mxu0 0
        %233 = vmatpush.bf16.msra.mxu0 0
        %234 = vmatpush.bf16.msra.mxu0 0
        %235 = vmatpush.bf16.msra.mxu0 0
        %236 = vmatpush.bf16.msra.mxu0 0
        %237 = vmatpush.bf16.msra.mxu0 0
        %238 = vmatpush.bf16.msra.mxu0 %v223
        %239 = vmatmul.bf16.gmra.mxu0 %v211
        %v240 = vpop.f32.mrf.mxu0
        %v241 = vadd.f32 0.0, %v240
        %v242 = vpop.f32.mrf.mxu0
        %v243 = vadd.f32 0.0, %v242
        %244 = vmatmul.bf16.gmra.mxu0 %v214
        %v245 = vpop.f32.mrf.mxu0
        %v246 = vadd.f32 0.0, %v245
        %v247 = vpop.f32.mrf.mxu0
        %v248 = vadd.f32 0.0, %v247
        %249 = vmatmul.bf16.gmra.mxu0 %v217
        %v250 = vpop.f32.mrf.mxu0
        %v251 = vadd.f32 0.0, %v250
        %v252 = vpop.f32.mrf.mxu0
        %v253 = vadd.f32 0.0, %v252
        %254 = vmatmul.bf16.gmra.mxu0 %v220
        %v255 = vpop.f32.mrf.mxu0
        %v256 = vadd.f32 0.0, %v255
        %v257 = vpop.f32.mrf.mxu0
        %v258 = vadd.f32 0.0, %v257
        %259 = vdwg.mxu0
        %260 = vmatpush.bf16.msra.mxu0 0
        %261 = vmatpush.bf16.msra.mxu0 0
        %262 = vmatpush.bf16.msra.mxu0 0
        %263 = vmatpush.bf16.msra.mxu0 0
        %264 = vmatpush.bf16.msra.mxu0 0
        %265 = vmatpush.bf16.msra.mxu0 0
        %266 = vmatpush.bf16.msra.mxu0 0
        %267 = vmatpush.bf16.msra.mxu0 %v225
        %268 = vmatmul.bf16.gmra.mxu0 %v211
        %v269 = vpop.f32.mrf.mxu0
        %v270 = vadd.f32 0.0, %v269
        %v271 = vpop.f32.mrf.mxu0
        %v272 = vadd.f32 0.0, %v271
        %273 = vmatmul.bf16.gmra.mxu0 %v214
        %v274 = vpop.f32.mrf.mxu0
        %v275 = vadd.f32 0.0, %v274
        %v276 = vpop.f32.mrf.mxu0
        %v277 = vadd.f32 0.0, %v276
        %278 = vmatmul.bf16.gmra.mxu0 %v217
        %v279 = vpop.f32.mrf.mxu0
        %v280 = vadd.f32 0.0, %v279
        %v281 = vpop.f32.mrf.mxu0
        %v282 = vadd.f32 0.0, %v281
        %283 = vmatmul.bf16.gmra.mxu0 %v220
        %v284 = vpop.f32.mrf.mxu0
        %v285 = vadd.f32 0.0, %v284
        %v286 = vpop.f32.mrf.mxu0
        %v287 = vadd.f32 0.0, %v286
        %288 = vdwg.mxu0
        %289 = vmatpush.bf16.msra.mxu0 0
        %290 = vmatpush.bf16.msra.mxu0 0
        %291 = vmatpush.bf16.msra.mxu0 0
        %292 = vmatpush.bf16.msra.mxu0 0
        %293 = vmatpush.bf16.msra.mxu0 0
        %294 = vmatpush.bf16.msra.mxu0 0
        %295 = vmatpush.bf16.msra.mxu0 0
        %296 = vmatpush.bf16.msra.mxu0 %v227
        %297 = vmatmul.bf16.gmra.mxu0 %v211
        %v298 = vpop.f32.mrf.mxu0
        %v299 = vadd.f32 0.0, %v298
        %v300 = vpop.f32.mrf.mxu0
        %v301 = vadd.f32 0.0, %v300
        %302 = vmatmul.bf16.gmra.mxu0 %v214
        %v303 = vpop.f32.mrf.mxu0
        %v304 = vadd.f32 0.0, %v303
        %v305 = vpop.f32.mrf.mxu0
        %v306 = vadd.f32 0.0, %v305
        %307 = vmatmul.bf16.gmra.mxu0 %v217
        %v308 = vpop.f32.mrf.mxu0
        %v309 = vadd.f32 0.0, %v308
        %v310 = vpop.f32.mrf.mxu0
        %v311 = vadd.f32 0.0, %v310
        %312 = vmatmul.bf16.gmra.mxu0 %v220
        %v313 = vpop.f32.mrf.mxu0
        %v314 = vadd.f32 0.0, %v313
        %v315 = vpop.f32.mrf.mxu0
        %v316 = vadd.f32 0.0, %v315
        %317 = vdwg.mxu0
        %318 = vmatpush.bf16.msra.mxu0 0
        %319 = vmatpush.bf16.msra.mxu0 0
        %320 = vmatpush.bf16.msra.mxu0 0
        %321 = vmatpush.bf16.msra.mxu0 0
        %322 = vmatpush.bf16.msra.mxu0 0
        %323 = vmatpush.bf16.msra.mxu0 0
        %324 = vmatpush.bf16.msra.mxu0 0
        %325 = vmatpush.bf16.msra.mxu0 %v229
        %326 = vmatmul.bf16.gmra.mxu0 %v211
        %v327 = vpop.f32.mrf.mxu0
        %v328 = vadd.f32 0.0, %v327
        %v329 = vpop.f32.mrf.mxu0
        %v330 = vadd.f32 0.0, %v329
        %331 = vmatmul.bf16.gmra.mxu0 %v214
        %v332 = vpop.f32.mrf.mxu0
        %v333 = vadd.f32 0.0, %v332
        %v334 = vpop.f32.mrf.mxu0
        %v335 = vadd.f32 0.0, %v334
        %336 = vmatmul.bf16.gmra.mxu0 %v217
        %v337 = vpop.f32.mrf.mxu0
        %v338 = vadd.f32 0.0, %v337
        %v339 = vpop.f32.mrf.mxu0
        %v340 = vadd.f32 0.0, %v339
        %341 = vmatmul.bf16.gmra.mxu0 %v220
        %v342 = vpop.f32.mrf.mxu0
        %v343 = vadd.f32 0.0, %v342
        %v344 = vpop.f32.mrf.mxu0
        %v345 = vadd.f32 0.0, %v344
        %346 = vdwg.mxu0
        %v347 = vmax.f32 %v241, 0.0
        %v348 = vmax.f32 %v270, 0.0
        %v349 = vmax.f32 %v299, 0.0
        %v350 = vmax.f32 %v328, 0.0
        %v351 = vmax.f32 %v243, 0.0
        %v352 = vmax.f32 %v272, 0.0
        %v353 = vmax.f32 %v301, 0.0
        %v354 = vmax.f32 %v330, 0.0
        %v355 = vmax.f32 %v246, 0.0
        %v356 = vmax.f32 %v275, 0.0
        %v357 = vmax.f32 %v304, 0.0
        %v358 = vmax.f32 %v333, 0.0
        %v359 = vmax.f32 %v248, 0.0
        %v360 = vmax.f32 %v277, 0.0
        %v361 = vmax.f32 %v306, 0.0
        %v362 = vmax.f32 %v335, 0.0
        %v363 = vmax.f32 %v251, 0.0
        %v364 = vmax.f32 %v280, 0.0
        %v365 = vmax.f32 %v309, 0.0
        %v366 = vmax.f32 %v338, 0.0
        %v367 = vmax.f32 %v253, 0.0
        %v368 = vmax.f32 %v282, 0.0
        %v369 = vmax.f32 %v311, 0.0
        %v370 = vmax.f32 %v340, 0.0
        %v371 = vmax.f32 %v256, 0.0
        %v372 = vmax.f32 %v285, 0.0
        %v373 = vmax.f32 %v314, 0.0
        %v374 = vmax.f32 %v343, 0.0
        %v375 = vmax.f32 %v258, 0.0
        %v376 = vmax.f32 %v287, 0.0
        %v377 = vmax.f32 %v316, 0.0
        %v378 = vmax.f32 %v345, 0.0
        %379 = vst [vmem:[%s161] sm:$0xff] %v347
        %380 = vst [vmem:[%s161 + $0x8] sm:$0xff] %v348
        %381 = vst [vmem:[%s161 + $0x10] sm:$0xff] %v349
        %382 = vst [vmem:[%s161 + $0x18] sm:$0xff] %v350
        %383 = vst [vmem:[%s161 + $0x20] sm:$0xff] %v351
        %384 = vst [vmem:[%s161 + $0x28] sm:$0xff] %v352
        %385 = vst [vmem:[%s161 + $0x30] sm:$0xff] %v353
        %386 = vst [vmem:[%s161 + $0x38] sm:$0xff] %v354
        %387 = vst [vmem:[%s161 + $0x40] sm:$0xff] %v355
        %388 = vst [vmem:[%s161 + $0x48] sm:$0xff] %v356
        %389 = vst [vmem:[%s161 + $0x50] sm:$0xff] %v357
        %390 = vst [vmem:[%s161 + $0x58] sm:$0xff] %v358
        %391 = vst [vmem:[%s161 + $0x60] sm:$0xff] %v359
        %392 = vst [vmem:[%s161 + $0x68] sm:$0xff] %v360
        %393 = vst [vmem:[%s161 + $0x70] sm:$0xff] %v361
        %394 = vst [vmem:[%s161 + $0x78] sm:$0xff] %v362
        %395 = vst [vmem:[%s161 + $0x80] sm:$0xff] %v363
        %396 = vst [vmem:[%s161 + $0x88] sm:$0xff] %v364
        %397 = vst [vmem:[%s161 + $0x90] sm:$0xff] %v365
        %398 = vst [vmem:[%s161 + $0x98] sm:$0xff] %v366
        %399 = vst [vmem:[%s161 + $0xa0] sm:$0xff] %v367
        %400 = vst [vmem:[%s161 + $0xa8] sm:$0xff] %v368
        %401 = vst [vmem:[%s161 + $0xb0] sm:$0xff] %v369
        %402 = vst [vmem:[%s161 + $0xb8] sm:$0xff] %v370
        %403 = vst [vmem:[%s161 + $0xc0] sm:$0xff] %v371
        %404 = vst [vmem:[%s161 + $0xc8] sm:$0xff] %v372
        %405 = vst [vmem:[%s161 + $0xd0] sm:$0xff] %v373
        %406 = vst [vmem:[%s161 + $0xd8] sm:$0xff] %v374
        %407 = vst [vmem:[%s161 + $0xe0] sm:$0xff] %v375
        %408 = vst [vmem:[%s161 + $0xe8] sm:$0xff] %v376
        %409 = vst [vmem:[%s161 + $0xf0] sm:$0xff] %v377
        %410 = vst [vmem:[%s161 + $0xf8] sm:$0xff] %v378
        %s411 = sand.u32 %s87, 1
        %s412 = scalar_lea.sflag [#allocation3], %s411
        %s413 = sand.u32 %s87, 1
        %s414 = smul.addr %s413, 256
        %s415 = scalar_lea.vmem [#allocation2], %s414
        // Predicated region
        $region29: #{tpu_custom_call.1} parent=27 // pred_check
          %p416 = pneg %p97
        $region30: #{tpu_custom_call.1} parent=27 // pred_check_branch
          %418 = sbr.rel (%p416) target = $region32
        $region31: #{tpu_custom_call.1} parent=27 // pred_region
          %s419 = smul.u32 4, %s21
          %421 = vsyncadd %s412, 0
          %s422 = smul.addr %s20, 32
          %s423 = sadd.s32 %s419, %s422
          %s424 = smul.addr %s423, 8
          %s425 = scalar_lea.hbm %s2, %s424
          %s426 = sshll.u32 %s415, 4
          %s427 = int_to_ptr.vmem [resolvable:$true] %s426
          %s428 = sshll.u32 %s425, 4
          %s429 = int_to_ptr.hbm [resolvable:$true] %s428
          %434 = dma.vmem_to_hbm [thread:$0]  %s427, 4096, %s429, %s412, 512, 512, 32
        $region32: #{tpu_custom_call.1} parent=27 // pred_fallthru
          _
      $region28: #{tpu_custom_call.1} parent=5 // pred_fallthru
        _
      %p435 = scmp.le.s32.totalorder 2, %s11
      // Predicated region
      $region33: #{tpu_custom_call.1} parent=5 // pred_check
        %p436 = pneg %p435
      $region34: #{tpu_custom_call.1} parent=5 // pred_check_branch
        %438 = sbr.rel (%p436) target = $region36
      $region35: #{tpu_custom_call.1} parent=5 // pred_region
        %s439 = ssub.s32 %s11, 2
        // Predicated region
        $region37: #{tpu_custom_call.1} parent=35 // pred_check
          %p440 = pneg %p103
        $region38: #{tpu_custom_call.1} parent=35 // pred_check_branch
          %442 = sbr.rel (%p440) target = $region40
        $region39: #{tpu_custom_call.1} parent=35 // pred_region
          %s443 = sand.u32 %s88, 1
          %s444 = scalar_lea.sflag [#allocation3], %s443
          %s445 = sand.u32 %s88, 1
          %s446 = smul.addr %s445, 256
          %s447 = scalar_lea.vmem [#allocation2], %s446
          %449 = dma.done %s444, 4096
        $region40: #{tpu_custom_call.1} parent=35 // pred_fallthru
          _
      $region36: #{tpu_custom_call.1} parent=5 // pred_fallthru
        _
    $region6: #{tpu_custom_call.1} parent=1 // loop_footer
      %s15 = sadd.s32 1, %s11
    $region7: #{tpu_custom_call.1} parent=1 // loop_footer_branch
      %10 = sbr.rel target = $region3
    $region8: #{tpu_custom_call.1} parent=1 // loop_exit
      _
    %450 = vsyncpa [#allocation3], 1
    %s451 = scalar_lea.sflag [#allocation3], 1
    %452 = vsyncpa %s451, 1

</llo_original>
